<compile_context>
chip_gen: v6e
topology: v6e:2x2x1
jax: 0.10.0
libtpu: 0.0.40
codegen_flags: <defaults>
</compile_context>

<pallas_src>
import jax
import jax.numpy as jnp
from jax.experimental import pallas as pl
from jax.experimental.pallas import tpu as pltpu


def _conv_gemm_kernel(p_ref, w_ref, b_ref, o_ref):
    # p_ref: (K, N*S)   w_ref: (Cout, K)   b_ref: (Cout, 1)   o_ref: (Cout, N*S)
    acc = jnp.dot(w_ref[...], p_ref[...],
                  preferred_element_type=jnp.float32)        # one MXU GEMM
    o_ref[...] = (acc + b_ref[...]).astype(o_ref.dtype)      # bias on VPU, lane-dense store


def conv2d_pallas(x_nchw, w_oihw, bias):
    """Conv2d(stride=1, padding=0) matching torch.nn.Conv2d semantics.

    x_nchw : (N, Cin, H, W)
    w_oihw : (Cout, Cin, KH, KW)   (PyTorch weight layout)
    bias   : (Cout,)
    returns: (N, Cout, OH, OW)
    """
    n, cin, h, w = x_nchw.shape
    cout, cin_w, kh, kw = w_oihw.shape
    assert cin == cin_w
    oh, ow = h - kh + 1, w - kw + 1
    s = oh * ow
    k = cin * kh * kw
    ns = n * s

    # --- im2col in ONE XLA op.  "CNHW" out spec -> (K, N, OH, OW); feature
    # ordering is channel-major (c slowest, then kh, kw), matching the OIHW
    # weight flatten below.  Trailing-dim merge to (K, N*S) is free.
    patches = jax.lax.conv_general_dilated_patches(
        x_nchw, filter_shape=(kh, kw), window_strides=(1, 1), padding="VALID",
        dimension_numbers=("NCHW", "OIHW", "CNHW"))
    p_mat = patches.reshape(k, ns)                             # (K, N*S)

    w_mat = w_oihw.reshape(cout, k)                            # (Cout, K)
    b_col = bias.reshape(cout, 1).astype(w_mat.dtype)          # (Cout, 1)

    cost = pl.CostEstimate(
        flops=2 * cout * k * ns,
        transcendentals=0,
        bytes_accessed=4 * (k * ns + cout * k + cout + cout * ns))

    out_flat = pl.pallas_call(
        _conv_gemm_kernel,
        out_shape=jax.ShapeDtypeStruct((cout, ns), x_nchw.dtype),
        grid_spec=pltpu.PrefetchScalarGridSpec(
            num_scalar_prefetch=0,
            grid=(1,),                     # whole problem in one VMEM block
            in_specs=[
                pl.BlockSpec((k, ns), lambda i: (0, 0)),
                pl.BlockSpec((cout, k), lambda i: (0, 0)),
                pl.BlockSpec((cout, 1), lambda i: (0, 0)),
            ],
            out_specs=pl.BlockSpec((cout, ns), lambda i: (0, 0)),
        ),
        compiler_params=pltpu.CompilerParams(
            dimension_semantics=("arbitrary",)),
        cost_estimate=cost,
    )(p_mat, w_mat, b_col)

    # (Cout, N*S) -> (N, Cout, OH, OW): trailing split + one tiny transpose.
    return out_flat.reshape(cout, n, oh, ow).transpose(1, 0, 2, 3)


if __name__ == "__main__":
    key = jax.random.PRNGKey(0)
    kx, kw_, kb = jax.random.split(key, 3)

    # Input consistent with Conv2d(3, 4, 3): small batch, 3 channels, 16x16.
    x = jax.random.normal(kx, (2, 3, 16, 16), dtype=jnp.float32)

    # Deterministic parameter init (shapes from nn.Conv2d(3, 4, kernel_size=3)).
    weight = jax.random.normal(kw_, (4, 3, 3, 3), dtype=jnp.float32) * 0.1
    bias = jax.random.normal(kb, (4,), dtype=jnp.float32) * 0.1

    out = conv2d_pallas(x, weight, bias)
    out = jax.block_until_ready(out)

    # Sanity check against XLA's convolution (same NCHW / OIHW semantics).
    ref = jax.lax.conv_general_dilated(
        x, weight, window_strides=(1, 1), padding="VALID",
        dimension_numbers=("NCHW", "OIHW", "NCHW"),
    ) + bias.reshape(1, 4, 1, 1)

    assert out.shape == (2, 4, 14, 14), out.shape
    assert jnp.allclose(out, ref, atol=1e-4, rtol=1e-4), "mismatch vs reference"

    print("KERNEL_OK")
</pallas_src>

<mosaic_0001>
module attributes {stable_mosaic.version = 11 : i64} {
  func.func @_conv_gemm_kernel(%arg0: i32, %arg1: memref<27x392xf32, #tpu.memory_space<vmem>>, %arg2: memref<4x27xf32, #tpu.memory_space<vmem>>, %arg3: memref<4x1xf32, #tpu.memory_space<vmem>>, %arg4: memref<4x392xf32, #tpu.memory_space<vmem>>) attributes {dimension_semantics = [#tpu.dimension_semantics<arbitrary>], iteration_bounds = array<i64: 1>, scalar_prefetch = 0 : i64, scratch_operands = 0 : i64, tpu.core_type = #tpu.core_type<tc>, window_params = [{pipeline_mode = #tpu.pipeline_mode<synchronous>, transform_indices = @transform_0, window_bounds = array<i64: 27, 392>}, {pipeline_mode = #tpu.pipeline_mode<synchronous>, transform_indices = @transform_1, window_bounds = array<i64: 4, 27>}, {pipeline_mode = #tpu.pipeline_mode<synchronous>, transform_indices = @transform_2, window_bounds = array<i64: 4, 1>}, {pipeline_mode = #tpu.pipeline_mode<synchronous>, transform_indices = @transform_3, window_bounds = array<i64: 4, 392>}]} {
    %c0 = arith.constant 0 : index
    %c0_0 = arith.constant 0 : index
    %0 = vector.load %arg2[%c0, %c0_0] : memref<4x27xf32, #tpu.memory_space<vmem>>, vector<4x27xf32>
    %c0_1 = arith.constant 0 : index
    %c0_2 = arith.constant 0 : index
    %1 = vector.load %arg1[%c0_1, %c0_2] : memref<27x392xf32, #tpu.memory_space<vmem>>, vector<27x392xf32>
    %cst = arith.constant dense<0.000000e+00> : vector<4x392xf32>
    %2 = tpu.matmul %0, %1, %cst {dimension_numbers = #tpu.dot_dimension_numbers<[1], [0], [0], [1], [0, 0, 1, 1], [], []>} : vector<4x27xf32>, vector<27x392xf32>, vector<4x392xf32> -> vector<4x392xf32>
    %c0_3 = arith.constant 0 : index
    %c0_4 = arith.constant 0 : index
    %3 = vector.load %arg3[%c0_3, %c0_4] : memref<4x1xf32, #tpu.memory_space<vmem>>, vector<4x1xf32>
    %4 = vector.broadcast %3 : vector<4x1xf32> to vector<4x392xf32>
    %5 = arith.addf %2, %4 : vector<4x392xf32>
    %c0_5 = arith.constant 0 : index
    %c0_6 = arith.constant 0 : index
    %6 = vector.load %arg4[%c0_5, %c0_6] : memref<4x392xf32, #tpu.memory_space<vmem>>, vector<4x392xf32>
    tpu.vector_store %arg4[%c0_5, %c0_6], %5 {strides = array<i32>} : memref<4x392xf32, #tpu.memory_space<vmem>>, vector<4x392xf32>,
    return
  }
  func.func @transform_0(%arg0: i32) -> (i32, i32) {
    %c0_i32 = arith.constant 0 : i32
    %c0_i32_0 = arith.constant 0 : i32
    %c0_i32_1 = arith.constant 0 : i32
    return %c0_i32, %c0_i32_0 : i32, i32
  }
  func.func @transform_1(%arg0: i32) -> (i32, i32) {
    %c0_i32 = arith.constant 0 : i32
    %c0_i32_0 = arith.constant 0 : i32
    %c0_i32_1 = arith.constant 0 : i32
    return %c0_i32, %c0_i32_0 : i32, i32
  }
  func.func @transform_2(%arg0: i32) -> (i32, i32) {
    %c0_i32 = arith.constant 0 : i32
    %c0_i32_0 = arith.constant 0 : i32
    %c0_i32_1 = arith.constant 0 : i32
    return %c0_i32, %c0_i32_0 : i32, i32
  }
  func.func @transform_3(%arg0: i32) -> (i32, i32) {
    %c0_i32 = arith.constant 0 : i32
    %c0_i32_0 = arith.constant 0 : i32
    %c0_i32_1 = arith.constant 0 : i32
    return %c0_i32, %c0_i32_0 : i32, i32
  }
}

</mosaic_0001>

<llo_original>
// kernel: tpu_custom_call.1
$region0: #{tpu_custom_call.1}
  #allocation0 [shape = 'u32[]', space=smem, size = 0x4, offset = 0x4, fixed_abs, tag = 'smem constant byte address 0x4 - core index']
  #allocation1 [shape = 'u32[144,128]{1,0:T(1,128)}', space=vmem, size = 0x12000, scoped, tag = 'internal scratch']
  %s0 = inlined_call_operand.hbm [shape: f32[27,392], index: 0, kind: input, shape index: {}]
  %s1 = inlined_call_operand.vmem [shape: f32[4,27], index: 1, kind: input, shape index: {}]
  %s2 = inlined_call_operand.vmem [shape: f32[4,1], index: 2, kind: input, shape index: {}]
  %s3 = inlined_call_operand.hbm [shape: f32[4,392], index: 3, kind: output, shape index: {}]
  %s4 = sld [smem:[#allocation0]]
  $region26: #{tpu_custom_call.1} parent=0
    _
  %s6 = ssub.s32 1, %s4
  %s7 = scalar_select 0, %s6, %s4
  $region1: #{tpu_custom_call.1} parent=0
    #allocation2 [shape = 'u8[65536]{0}', space=vmem, size = 0x10000, scoped, tag = 'input window, operand 0, single buffered']
    #allocation3 [shape = 's32[1]{0}', space=sflag, size = 0x4, scoped, tag = 'scoped memory for tpu_custom_call.1']
    #allocation4 [shape = 's32[1]{0}', space=sflag, size = 0x4, scoped, tag = 'scoped memory for tpu_custom_call.1']
    #allocation5 [shape = 'u8[8192]{0}', space=vmem, size = 0x2000, scoped, tag = 'output window, operand 0, single buffered']
    %8 = vsyncpa [#allocation3], 0
    %9 = vsyncpa [#allocation4], 0
    // Predicated region
    $region2: #{tpu_custom_call.1} parent=1 // pred_check
      _
    $region3: #{tpu_custom_call.1} parent=1 // pred_check_branch
      %11 = sbr.rel (0) target = $region5
    $region4: #{tpu_custom_call.1} parent=1 // pred_region
      %s13 = ssub.s32 2048, 2048
      %14 = vsyncadd [#allocation3], %s13
      %s15 = sshll.u32 [#allocation2], 4
      %s16 = int_to_ptr.vmem [resolvable:$true] %s15
      %21 = dma.hbm_to_vmem [thread:$0]  %s0, 2048, %s16, [#allocation3], 512, 512, 32
    $region5: #{tpu_custom_call.1} parent=1 // pred_fallthru
      _
    // Predicated region
    $region6: #{tpu_custom_call.1} parent=1 // pred_check
      _
    $region7: #{tpu_custom_call.1} parent=1 // pred_check_branch
      %23 = sbr.rel (0) target = $region9
    $region8: #{tpu_custom_call.1} parent=1 // pred_region
      _
    $region9: #{tpu_custom_call.1} parent=1 // pred_fallthru
      _
    // Predicated region
    $region10: #{tpu_custom_call.1} parent=1 // pred_check
      _
    $region11: #{tpu_custom_call.1} parent=1 // pred_check_branch
      %25 = sbr.rel (0) target = $region13
    $region12: #{tpu_custom_call.1} parent=1 // pred_region
      _
    $region13: #{tpu_custom_call.1} parent=1 // pred_fallthru
      _
    // Predicated region
    $region14: #{tpu_custom_call.1} parent=1 // pred_check
      _
    $region15: #{tpu_custom_call.1} parent=1 // pred_check_branch
      %27 = sbr.rel (0) target = $region17
    $region16: #{tpu_custom_call.1} parent=1 // pred_region
      %28 = dma.done [#allocation3], 2048
    $region17: #{tpu_custom_call.1} parent=1 // pred_fallthru
      _
    %v29 = vld [vmem:[%s1] sm:$0xf]
    %v30 = vld [vmem:[#allocation2] sm:$0xff]
    %v31 = vld [vmem:[#allocation2 + $0x8] sm:$0xff]
    %v32 = vld [vmem:[#allocation2 + $0x10] sm:$0xff]
    %v33 = vld [vmem:[#allocation2 + $0x18] sm:$0xff]
    %v34 = vld [vmem:[#allocation2 + $0x20] sm:$0xff]
    %v35 = vld [vmem:[#allocation2 + $0x28] sm:$0xff]
    %v36 = vld [vmem:[#allocation2 + $0x30] sm:$0xff]
    %v37 = vld [vmem:[#allocation2 + $0x38] sm:$0xff]
    %v38 = vld [vmem:[#allocation2 + $0x40] sm:$0xff]
    %v39 = vld [vmem:[#allocation2 + $0x48] sm:$0xff]
    %v40 = vld [vmem:[#allocation2 + $0x50] sm:$0xff]
    %v41 = vld [vmem:[#allocation2 + $0x58] sm:$0xff]
    %v42 = vld [vmem:[#allocation2 + $0x60] sm:$0x7]
    %v43 = vld [vmem:[#allocation2 + $0x68] sm:$0x7]
    %v44 = vld [vmem:[#allocation2 + $0x70] sm:$0x7]
    %v45 = vld [vmem:[#allocation2 + $0x78] sm:$0x7]
    %v46 = vld [vmem:[%s2] sm:$0xf]
    %48 = vset.pattern.permute.xlu0 0
    %49 = vperm.xlu0 %48, %v46
    %v50 = vpop.permute.xlu0 %49
    %vm52 = vcmask 220160
    %v54 = vsel %vm52, %v29, 0
    %vm56 = vcmask 1042432
    %v58 = vsel %vm56, %v42, 0
    %v61 = vsel %vm56, %v43, 0
    %v64 = vsel %vm56, %v44, 0
    %v67 = vsel %vm56, %v45, 0
    %69 = vmatprep.subr.mxu0 0.0
    %70 = vmatpush1.msra.mxu0 0.0
    %71 = vmatprep.subr.mxu0 0.0
    %72 = vmatpush1.msra.mxu0 0.0
    %73 = vmatprep.subr.mxu0 0.0
    %74 = vmatpush1.msra.mxu0 0.0
    %75 = vmatprep.subr.mxu0 0.0
    %76 = vmatpush1.msra.mxu0 0.0
    %77 = vmatprep.subr.mxu0 0.0
    %78 = vmatpush1.msra.mxu0 0.0
    %79 = vmatprep.subr.mxu0 0.0
    %80 = vmatpush1.msra.mxu0 0.0
    %81 = vmatprep.subr.mxu0 0.0
    %82 = vmatpush1.msra.mxu0 0.0
    %83 = vmatprep.subr.mxu0 0.0
    %84 = vmatpush1.msra.mxu0 0.0
    %85 = vmatprep.subr.mxu0 0.0
    %86 = vmatpush1.msra.mxu0 0.0
    %87 = vmatprep.subr.mxu0 0.0
    %88 = vmatpush1.msra.mxu0 0.0
    %89 = vmatprep.subr.mxu0 0.0
    %90 = vmatpush1.msra.mxu0 0.0
    %91 = vmatprep.subr.mxu0 0.0
    %92 = vmatpush1.msra.mxu0 0.0
    %93 = vmatprep.subr.mxu0 %v61
    %94 = vmatpush1.msra.mxu0 %v58
    %95 = vmatprep.subr.mxu0 %v39
    %96 = vmatpush1.msra.mxu0 %v38
    %97 = vmatprep.subr.mxu0 %v35
    %98 = vmatpush1.msra.mxu0 %v34
    %99 = vmatprep.subr.mxu0 %v31
    %100 = vmatpush1.msra.mxu0 %v30
    %101 = vmatprep.subr.mxu0 0.0
    %102 = vmatpush2.msra.mxu0 0.0
    %103 = vmatprep.subr.mxu0 0.0
    %104 = vmatpush2.msra.mxu0 0.0
    %105 = vmatprep.subr.mxu0 0.0
    %106 = vmatpush2.msra.mxu0 0.0
    %107 = vmatprep.subr.mxu0 0.0
    %108 = vmatpush2.msra.mxu0 0.0
    %109 = vmatprep.subr.mxu0 0.0
    %110 = vmatpush2.msra.mxu0 0.0
    %111 = vmatprep.subr.mxu0 0.0
    %112 = vmatpush2.msra.mxu0 0.0
    %113 = vmatprep.subr.mxu0 0.0
    %114 = vmatpush2.msra.mxu0 0.0
    %115 = vmatprep.subr.mxu0 0.0
    %116 = vmatpush2.msra.mxu0 0.0
    %117 = vmatprep.subr.mxu0 0.0
    %118 = vmatpush2.msra.mxu0 0.0
    %119 = vmatprep.subr.mxu0 0.0
    %120 = vmatpush2.msra.mxu0 0.0
    %121 = vmatprep.subr.mxu0 0.0
    %122 = vmatpush2.msra.mxu0 0.0
    %123 = vmatprep.subr.mxu0 0.0
    %124 = vmatpush2.msra.mxu0 0.0
    %125 = vmatprep.subr.mxu0 0.0
    %126 = vmatpush2.msra.mxu0 0.0
    %127 = vmatprep.subr.mxu0 0.0
    %128 = vmatpush2.msra.mxu0 0.0
    %129 = vmatprep.subr.mxu0 0.0
    %130 = vmatpush2.msra.mxu0 0.0
    %131 = vmatprep.subr.mxu0 0.0
    %132 = vmatpush2.msra.mxu0 0.0
    %133 = vmatprep.mubr.f32.mxu0 0.0
    %134 = vmatmul.mubr.f32.gmra.mxu0 %v54
    %v135 = vpop.f32.mrf.mxu0
    %v136 = vadd.f32 %v50, %v135
    %v137 = vpop.f32.mrf.mxu0
    %v138 = vadd.f32 %v50, %v137
    %139 = vdwg.mxu0
    %140 = vmatprep.subr.mxu0 0.0
    %141 = vmatpush1.msra.mxu0 0.0
    %142 = vmatprep.subr.mxu0 0.0
    %143 = vmatpush1.msra.mxu0 0.0
    %144 = vmatprep.subr.mxu0 0.0
    %145 = vmatpush1.msra.mxu0 0.0
    %146 = vmatprep.subr.mxu0 0.0
    %147 = vmatpush1.msra.mxu0 0.0
    %148 = vmatprep.subr.mxu0 0.0
    %149 = vmatpush1.msra.mxu0 0.0
    %150 = vmatprep.subr.mxu0 0.0
    %151 = vmatpush1.msra.mxu0 0.0
    %152 = vmatprep.subr.mxu0 0.0
    %153 = vmatpush1.msra.mxu0 0.0
    %154 = vmatprep.subr.mxu0 0.0
    %155 = vmatpush1.msra.mxu0 0.0
    %156 = vmatprep.subr.mxu0 0.0
    %157 = vmatpush1.msra.mxu0 0.0
    %158 = vmatprep.subr.mxu0 0.0
    %159 = vmatpush1.msra.mxu0 0.0
    %160 = vmatprep.subr.mxu0 0.0
    %161 = vmatpush1.msra.mxu0 0.0
    %162 = vmatprep.subr.mxu0 0.0
    %163 = vmatpush1.msra.mxu0 0.0
    %164 = vmatprep.subr.mxu0 %v67
    %165 = vmatpush1.msra.mxu0 %v64
    %166 = vmatprep.subr.mxu0 %v41
    %167 = vmatpush1.msra.mxu0 %v40
    %168 = vmatprep.subr.mxu0 %v37
    %169 = vmatpush1.msra.mxu0 %v36
    %170 = vmatprep.subr.mxu0 %v33
    %171 = vmatpush1.msra.mxu0 %v32
    %172 = vmatprep.subr.mxu0 0.0
    %173 = vmatpush2.msra.mxu0 0.0
    %174 = vmatprep.subr.mxu0 0.0
    %175 = vmatpush2.msra.mxu0 0.0
    %176 = vmatprep.subr.mxu0 0.0
    %177 = vmatpush2.msra.mxu0 0.0
    %178 = vmatprep.subr.mxu0 0.0
    %179 = vmatpush2.msra.mxu0 0.0
    %180 = vmatprep.subr.mxu0 0.0
    %181 = vmatpush2.msra.mxu0 0.0
    %182 = vmatprep.subr.mxu0 0.0
    %183 = vmatpush2.msra.mxu0 0.0
    %184 = vmatprep.subr.mxu0 0.0
    %185 = vmatpush2.msra.mxu0 0.0
    %186 = vmatprep.subr.mxu0 0.0
    %187 = vmatpush2.msra.mxu0 0.0
    %188 = vmatprep.subr.mxu0 0.0
    %189 = vmatpush2.msra.mxu0 0.0
    %190 = vmatprep.subr.mxu0 0.0
    %191 = vmatpush2.msra.mxu0 0.0
    %192 = vmatprep.subr.mxu0 0.0
    %193 = vmatpush2.msra.mxu0 0.0
    %194 = vmatprep.subr.mxu0 0.0
    %195 = vmatpush2.msra.mxu0 0.0
    %196 = vmatprep.subr.mxu0 0.0
    %197 = vmatpush2.msra.mxu0 0.0
    %198 = vmatprep.subr.mxu0 0.0
    %199 = vmatpush2.msra.mxu0 0.0
    %200 = vmatprep.subr.mxu0 0.0
    %201 = vmatpush2.msra.mxu0 0.0
    %202 = vmatprep.subr.mxu0 0.0
    %203 = vmatpush2.msra.mxu0 0.0
    %204 = vmatprep.mubr.f32.mxu0 0.0
    %205 = vmatmul.mubr.f32.gmra.mxu0 %v54
    %v206 = vpop.f32.mrf.mxu0
    %v207 = vadd.f32 %v50, %v206
    %v208 = vpop.f32.mrf.mxu0
    %v209 = vadd.f32 %v50, %v208
    %210 = vdwg.mxu0
    %v215 = vcombine.low %v136, %v138
    %v216 = vcombine.low %v207, %v209
    %219 = vst [vmem:[#allocation5] sm:$0xff] %v215
    %vm220 = vcmask 1043456
    %vm221 = vcmask 64516
    %vm222 = vmor %vm221, %vm220
    %223 = vst.msk [vmem:[#allocation5 + $0x8] sm:$0xff] %vm222, %v216
    // Predicated region
    $region18: #{tpu_custom_call.1} parent=1 // pred_check
      _
    $region19: #{tpu_custom_call.1} parent=1 // pred_check_branch
      %225 = sbr.rel (0) target = $region21
    $region20: #{tpu_custom_call.1} parent=1 // pred_region
      %s227 = ssub.s32 256, 256
      %228 = vsyncadd [#allocation4], %s227
      %s230 = sshll.u32 [#allocation5], 4
      %s231 = int_to_ptr.vmem [resolvable:$true] %s230
      %233 = dma.vmem_to_hbm [thread:$0]  %s231, 256, %s3, [#allocation4]
    $region21: #{tpu_custom_call.1} parent=1 // pred_fallthru
      _
    // Predicated region
    $region22: #{tpu_custom_call.1} parent=1 // pred_check
      _
    $region23: #{tpu_custom_call.1} parent=1 // pred_check_branch
      %235 = sbr.rel (0) target = $region25
    $region24: #{tpu_custom_call.1} parent=1 // pred_region
      %236 = dma.done [#allocation4], 256
    $region25: #{tpu_custom_call.1} parent=1 // pred_fallthru
      _
    %237 = vsyncpa [#allocation3], 1
    %238 = vsyncpa [#allocation4], 1

</llo_original>
